<compile_context>
chip_gen: v6e
topology: v6e:2x2x1
jax: 0.10.0
libtpu: 0.0.40
codegen_flags: <defaults>
</compile_context>

<pallas_src>
import functools

import jax
import jax.numpy as jnp
from jax import lax
from jax.experimental import pallas as pl
from jax.experimental.pallas import tpu as pltpu


def _dsconv_kernel(x_ref, wdw_ref, b1_ref, wbig_ref, b2_ref, o_ref, xpad_ref,
                   *, K, H, W, Cin, Cout, pad, Nb):
    # x_ref:    (Nb, H, W*Cin)          unpadded input block (lane axis = W*Cin)
    # wdw_ref:  (K*K, W*Cin)            depthwise taps * BN1 scale, tiled over W
    # b1_ref:   (1, W*Cin)              BN1 bias, tiled over W
    # wbig_ref: (W*Cin, W*Cout) bf16    kron(I_W, w_pw * BN2 scale)
    # b2_ref:   (1, W*Cout)             BN2 bias, tiled over W
    # o_ref:    (Nb, H, W*Cout)         lane-dense output block
    # xpad_ref: (Nb, H+2p, (W+2p)*Cin)  f32 VMEM scratch (halo)
    f32 = jnp.float32
    WCin = W * Cin
    WCout = W * Cout
    WpCin = (W + 2 * pad) * Cin

    # --- zero ONLY the halo frame (per-step; correct under megacore) --------
    xpad_ref[:, 0:pad, :] = jnp.zeros((Nb, pad, WpCin), f32)
    xpad_ref[:, pad + H:pad + H + pad, :] = jnp.zeros((Nb, pad, WpCin), f32)
    xpad_ref[:, pad:pad + H, 0:pad * Cin] = jnp.zeros((Nb, H, pad * Cin), f32)
    xpad_ref[:, pad:pad + H, pad * Cin + WCin:WpCin] = (
        jnp.zeros((Nb, H, pad * Cin), f32))

    # --- place the input block in the scratch interior ----------------------
    xpad_ref[:, pad:pad + H, pad * Cin:pad * Cin + WCin] = (
        x_ref[...].astype(f32))

    # --- depthwise conv (stride=1, dilation=1) as K*K shifted MACs ----------
    # kh -> sublane-offset ref load (K loads total); kw -> lane slice of the
    # in-register rows (XLU rotate + select), keeping the VALU free for MACs.
    w_taps = wdw_ref[...]                                  # hoisted once
    acc = jnp.zeros((Nb, H, WCin), f32)
    for kh in range(K):
        rows = xpad_ref[:, kh:kh + H, :]                   # (Nb, H, Wp*Cin)
        for kw in range(K):
            patch = rows[:, :, kw * Cin:kw * Cin + WCin]   # (Nb, H, W*Cin)
            acc = acc + patch * w_taps[kh * K + kw]

    # --- BN1 (scale pre-folded into taps) + ReLU, kept in f32 ---------------
    y = jnp.maximum(acc + b1_ref[0, :], 0.0)

    # --- pointwise 1x1 conv + BN2 scale: one block-diagonal MXU matmul ------
    # bf16 operands (native MXU dtype), f32 accumulation.
    z = jnp.dot(y.astype(jnp.bfloat16).reshape(Nb * H, WCin), wbig_ref[...],
                preferred_element_type=jnp.float32)
    z = jnp.maximum(z + b2_ref[0, :], 0.0)

    o_ref[...] = z.reshape(Nb, H, WCout).astype(o_ref.dtype)


def depthwise_separable_conv(x_nhwc, w_dw, w_pw,
                             bn1_gamma, bn1_beta, bn1_mean, bn1_var,
                             bn2_gamma, bn2_beta, bn2_mean, bn2_var,
                             *, padding=1, eps=1e-5, batch_block=None):
    """x_nhwc: (N, H, W, Cin); w_dw: (K, K, Cin); w_pw: (Cin, Cout)."""
    N, H, W, Cin = x_nhwc.shape
    K = w_dw.shape[0]
    Cout = w_pw.shape[1]
    assert w_dw.shape == (K, K, Cin)
    # This kernel assumes the module config used by LinkCrack: stride=1,
    # dilation=1, 'same' output size.  Fail loudly otherwise.
    assert 2 * padding == K - 1, "kernel assumes stride=1, dilation=1, Ho==H"

    # VMEM gate for the block-diagonal pointwise weight (quadratic in W and
    # 15/16 zeros): refuse shapes where it would blow the v7x VMEM budget.
    if (W * Cin) * (W * Cout) * 2 > (8 << 20):
        raise NotImplementedError(
            "TODO(synk): plain (rows, Cin) @ (Cin, Cout) pointwise path with "
            "H-row tiling + halo needed for large W*C shapes.")

    # --- batch tile picker ---------------------------------------------------
    # Prefer the smallest nb that fills the MXU M dim (nb*H >= 128) while
    # leaving a grid of >= 2 steps (pipelining + megacore).  If impossible,
    # still guarantee grid >= 2; otherwise one step over the whole batch.
    if batch_block is None:
        divisors = [d for d in range(1, N + 1) if N % d == 0]
        cands = [d for d in divisors if N // d >= 2 and d * H >= 128]
        if cands:
            nb = min(cands)
        else:
            cands = [d for d in divisors if N // d >= 2]
            nb = max(cands) if cands else N
    else:
        nb = batch_block
        assert N % nb == 0
    grid_len = N // nb

    # ---- host-side (glue) preprocessing: fold BN, retile weights -----------
    s1 = bn1_gamma / jnp.sqrt(bn1_var + eps)
    b1 = bn1_beta - bn1_mean * s1
    s2 = bn2_gamma / jnp.sqrt(bn2_var + eps)
    b2 = bn2_beta - bn2_mean * s2

    # Depthwise taps with BN1 scale folded in, tiled along W so each tap row
    # broadcasts over the flattened (W*Cin) lane axis.  Shape (K*K, W*Cin).
    w_dw_flat = jnp.tile((w_dw * s1[None, None, :]).reshape(K * K, Cin), (1, W))
    b1_flat = jnp.tile(b1, W).reshape(1, W * Cin).astype(jnp.float32)
    # Pointwise weight with BN2 scale folded in, expanded block-diagonally so
    # the 1x1 conv is one lane-dense matmul; stored in bf16 (MXU-native).
    w_big = jnp.kron(jnp.eye(W, dtype=jnp.float32),
                     (w_pw * s2[None, :]).astype(jnp.float32)
                     ).astype(jnp.bfloat16)
    b2_flat = jnp.tile(b2, W).reshape(1, W * Cout).astype(jnp.float32)

    # Free view: (N, H, W, Cin) -> (N, H, W*Cin) (contiguous reshape).
    # Note: W*Cout here is a multiple of 128, keeping output stores unmasked.
    x_flat = x_nhwc.reshape(N, H, W * Cin)

    Hp = H + 2 * padding
    Wp = W + 2 * padding

    kernel = functools.partial(_dsconv_kernel, K=K, H=H, W=W, Cin=Cin,
                               Cout=Cout, pad=padding, Nb=nb)

    # Per-step input blocks are tiny; once the grid is deep enough, request a
    # third buffer so the DMA issue latency hides behind the short body.
    if grid_len > 2:
        x_spec = pl.BlockSpec((nb, H, W * Cin), lambda b: (b, 0, 0),
                              pipeline_mode=pl.Buffered(3))
    else:
        x_spec = pl.BlockSpec((nb, H, W * Cin), lambda b: (b, 0, 0))

    out_flat = pl.pallas_call(
        kernel,
        out_shape=jax.ShapeDtypeStruct((N, H, W * Cout), x_nhwc.dtype),
        grid_spec=pltpu.PrefetchScalarGridSpec(
            num_scalar_prefetch=0,
            grid=(grid_len,),
            in_specs=[
                x_spec,                                                # x
                pl.BlockSpec((K * K, W * Cin), lambda b: (0, 0)),      # dw taps
                pl.BlockSpec((1, W * Cin), lambda b: (0, 0)),          # BN1 bias
                pl.BlockSpec((W * Cin, W * Cout), lambda b: (0, 0)),   # pw block-diag
                pl.BlockSpec((1, W * Cout), lambda b: (0, 0)),         # BN2 bias
            ],
            out_specs=pl.BlockSpec((nb, H, W * Cout), lambda b: (b, 0, 0)),
            scratch_shapes=[pltpu.VMEM((nb, Hp, Wp * Cin), jnp.float32)],
        ),
        compiler_params=pltpu.CompilerParams(dimension_semantics=("parallel",)),
    )(x_flat, w_dw_flat, b1_flat, w_big, b2_flat)

    return out_flat.reshape(N, H, W, Cout)


def _reference(x_nhwc, w_dw, w_pw, s1, b1, s2, b2):
    """Pure-JAX reference using lax.conv_general_dilated (f32, eval-mode BN)."""
    K, _, Cin = w_dw.shape
    Cout = w_pw.shape[1]
    dn = lax.conv_dimension_numbers(x_nhwc.shape, (K, K, 1, Cin),
                                    ("NHWC", "HWIO", "NHWC"))
    y = lax.conv_general_dilated(
        x_nhwc, w_dw[:, :, None, :], window_strides=(1, 1),
        padding=((1, 1), (1, 1)), dimension_numbers=dn,
        feature_group_count=Cin)
    y = jnp.maximum(y * s1 + b1, 0.0)
    dn2 = lax.conv_dimension_numbers(y.shape, (1, 1, Cin, Cout),
                                     ("NHWC", "HWIO", "NHWC"))
    y2 = lax.conv_general_dilated(
        y, w_pw[None, None, :, :], window_strides=(1, 1), padding="VALID",
        dimension_numbers=dn2)
    return jnp.maximum(y2 * s2 + b2, 0.0)


if __name__ == "__main__":
    # Small shapes consistent with the module: N=2, Cin=4, Cout=8, H=W=16,
    # kernel_size=3, stride=1, padding=1, dilation=1, bias=False.
    N, Cin, Cout, H, W, K = 2, 4, 8, 16, 16, 3
    key = jax.random.PRNGKey(0)
    kx, kdw, kpw, kg1, kb1, kg2, kb2, km1, kv1, km2, kv2 = jax.random.split(key, 11)

    x_nchw = jax.random.normal(kx, (N, Cin, H, W), dtype=jnp.float32)
    # Depthwise weight (PyTorch shape (Cin,1,K,K)) stored here as (K,K,Cin).
    w_dw = jax.random.normal(kdw, (K, K, Cin), dtype=jnp.float32) * 0.2
    # Pointwise weight (PyTorch shape (Cout,Cin,1,1)) stored here as (Cin,Cout).
    w_pw = jax.random.normal(kpw, (Cin, Cout), dtype=jnp.float32) * 0.2

    bn1_gamma = 1.0 + 0.1 * jax.random.normal(kg1, (Cin,), dtype=jnp.float32)
    bn1_beta = 0.1 * jax.random.normal(kb1, (Cin,), dtype=jnp.float32)
    bn1_mean = 0.05 * jax.random.normal(km1, (Cin,), dtype=jnp.float32)
    bn1_var = jnp.abs(1.0 + 0.1 * jax.random.normal(kv1, (Cin,), dtype=jnp.float32))
    bn2_gamma = 1.0 + 0.1 * jax.random.normal(kg2, (Cout,), dtype=jnp.float32)
    bn2_beta = 0.1 * jax.random.normal(kb2, (Cout,), dtype=jnp.float32)
    bn2_mean = 0.05 * jax.random.normal(km2, (Cout,), dtype=jnp.float32)
    bn2_var = jnp.abs(1.0 + 0.1 * jax.random.normal(kv2, (Cout,), dtype=jnp.float32))

    # NCHW (PyTorch convention) -> NHWC (kernel layout).
    x_nhwc = jnp.transpose(x_nchw, (0, 2, 3, 1))

    out_nhwc = depthwise_separable_conv(
        x_nhwc, w_dw, w_pw,
        bn1_gamma, bn1_beta, bn1_mean, bn1_var,
        bn2_gamma, bn2_beta, bn2_mean, bn2_var,
        padding=1)
    out_nhwc = jax.block_until_ready(out_nhwc)
    out_nchw = jnp.transpose(out_nhwc, (0, 3, 1, 2))
    assert out_nchw.shape == (N, Cout, H, W)

    # Sanity check against a pure-JAX f32 reference of the same eval-mode math.
    # Tolerance is loosened slightly because the kernel's pointwise matmul uses
    # bf16 MXU operands (f32 accumulation); real layout/halo bugs would be O(1).
    eps = 1e-5
    s1 = (bn1_gamma / jnp.sqrt(bn1_var + eps)).reshape(1, 1, 1, Cin)
    b1 = (bn1_beta - bn1_mean * bn1_gamma / jnp.sqrt(bn1_var + eps)).reshape(1, 1, 1, Cin)
    s2 = (bn2_gamma / jnp.sqrt(bn2_var + eps)).reshape(1, 1, 1, Cout)
    b2 = (bn2_beta - bn2_mean * bn2_gamma / jnp.sqrt(bn2_var + eps)).reshape(1, 1, 1, Cout)
    ref = _reference(x_nhwc, w_dw, w_pw, s1, b1, s2, b2)
    err = float(jnp.max(jnp.abs(out_nhwc - ref)))
    assert jnp.allclose(out_nhwc, ref, atol=5e-2, rtol=5e-2), err

    print("KERNEL_OK")
</pallas_src>

<mosaic_0001>
module attributes {stable_mosaic.version = 11 : i64} {
  func.func @_dsconv_kernel(%arg0: i32, %arg1: memref<1x16x64xf32, #tpu.memory_space<vmem>>, %arg2: memref<9x64xf32, #tpu.memory_space<vmem>>, %arg3: memref<1x64xf32, #tpu.memory_space<vmem>>, %arg4: memref<64x128xbf16, #tpu.memory_space<vmem>>, %arg5: memref<1x128xf32, #tpu.memory_space<vmem>>, %arg6: memref<1x16x128xf32, #tpu.memory_space<vmem>>, %arg7: memref<1x18x72xf32, #tpu.memory_space<vmem>>) attributes {dimension_semantics = [#tpu.dimension_semantics<parallel>], iteration_bounds = array<i64: 2>, scalar_prefetch = 0 : i64, scratch_operands = 1 : i64, tpu.core_type = #tpu.core_type<tc>, window_params = [{transform_indices = @transform_0, window_bounds = array<i64: 1, 16, 64>}, {pipeline_mode = #tpu.pipeline_mode<synchronous>, transform_indices = @transform_1, window_bounds = array<i64: 9, 64>}, {pipeline_mode = #tpu.pipeline_mode<synchronous>, transform_indices = @transform_2, window_bounds = array<i64: 1, 64>}, {pipeline_mode = #tpu.pipeline_mode<synchronous>, transform_indices = @transform_3, window_bounds = array<i64: 64, 128>}, {pipeline_mode = #tpu.pipeline_mode<synchronous>, transform_indices = @transform_4, window_bounds = array<i64: 1, 128>}, {transform_indices = @transform_5, window_bounds = array<i64: 1, 16, 128>}]} {
    %cst = arith.constant 0.000000e+00 : f32
    %0 = vector.broadcast %cst : f32 to vector<1x1x72xf32>
    %c0 = arith.constant 0 : index
    %c0_0 = arith.constant 0 : index
    %c0_1 = arith.constant 0 : index
    %1 = vector.load %arg7[%c0, %c0_0, %c0_1] : memref<1x18x72xf32, #tpu.memory_space<vmem>>, vector<1x1x72xf32>
    tpu.vector_store %arg7[%c0, %c0_0, %c0_1], %0 {strides = array<i32>} : memref<1x18x72xf32, #tpu.memory_space<vmem>>, vector<1x1x72xf32>,
    %cst_2 = arith.constant 0.000000e+00 : f32
    %2 = vector.broadcast %cst_2 : f32 to vector<1x1x72xf32>
    %c0_3 = arith.constant 0 : index
    %c17 = arith.constant 17 : index
    %c0_4 = arith.constant 0 : index
    %3 = vector.load %arg7[%c0_3, %c17, %c0_4] : memref<1x18x72xf32, #tpu.memory_space<vmem>>, vector<1x1x72xf32>
    tpu.vector_store %arg7[%c0_3, %c17, %c0_4], %2 {strides = array<i32>} : memref<1x18x72xf32, #tpu.memory_space<vmem>>, vector<1x1x72xf32>,
    %cst_5 = arith.constant 0.000000e+00 : f32
    %4 = vector.broadcast %cst_5 : f32 to vector<1x16x4xf32>
    %c0_6 = arith.constant 0 : index
    %c1 = arith.constant 1 : index
    %c0_7 = arith.constant 0 : index
    %5 = vector.load %arg7[%c0_6, %c1, %c0_7] : memref<1x18x72xf32, #tpu.memory_space<vmem>>, vector<1x16x4xf32>
    tpu.vector_store %arg7[%c0_6, %c1, %c0_7], %4 {strides = array<i32>} : memref<1x18x72xf32, #tpu.memory_space<vmem>>, vector<1x16x4xf32>,
    %cst_8 = arith.constant 0.000000e+00 : f32
    %6 = vector.broadcast %cst_8 : f32 to vector<1x16x4xf32>
    %c0_9 = arith.constant 0 : index
    %c1_10 = arith.constant 1 : index
    %c68 = arith.constant 68 : index
    %7 = vector.load %arg7[%c0_9, %c1_10, %c68] : memref<1x18x72xf32, #tpu.memory_space<vmem>>, vector<1x16x4xf32>
    tpu.vector_store %arg7[%c0_9, %c1_10, %c68], %6 {strides = array<i32>} : memref<1x18x72xf32, #tpu.memory_space<vmem>>, vector<1x16x4xf32>,
    %c0_11 = arith.constant 0 : index
    %c0_12 = arith.constant 0 : index
    %c0_13 = arith.constant 0 : index
    %8 = vector.load %arg1[%c0_11, %c0_12, %c0_13] : memref<1x16x64xf32, #tpu.memory_space<vmem>>, vector<1x16x64xf32>
    %c0_14 = arith.constant 0 : index
    %c1_15 = arith.constant 1 : index
    %c4 = arith.constant 4 : index
    %9 = vector.load %arg7[%c0_14, %c1_15, %c4] : memref<1x18x72xf32, #tpu.memory_space<vmem>>, vector<1x16x64xf32>
    tpu.vector_store %arg7[%c0_14, %c1_15, %c4], %8 {strides = array<i32>} : memref<1x18x72xf32, #tpu.memory_space<vmem>>, vector<1x16x64xf32>,
    %c0_16 = arith.constant 0 : index
    %c0_17 = arith.constant 0 : index
    %10 = vector.load %arg2[%c0_16, %c0_17] : memref<9x64xf32, #tpu.memory_space<vmem>>, vector<9x64xf32>
    %cst_18 = arith.constant 0.000000e+00 : f32
    %11 = vector.broadcast %cst_18 : f32 to vector<1x16x64xf32>
    %c0_19 = arith.constant 0 : index
    %c0_20 = arith.constant 0 : index
    %c0_21 = arith.constant 0 : index
    %12 = vector.load %arg7[%c0_19, %c0_20, %c0_21] : memref<1x18x72xf32, #tpu.memory_space<vmem>>, vector<1x16x72xf32>
    %13 = vector.extract_strided_slice %12 {offsets = [0, 0, 0], sizes = [1, 16, 64], strides = [1, 1, 1]} : vector<1x16x72xf32> to vector<1x16x64xf32>
    %14 = vector.extract_strided_slice %10 {offsets = [0, 0], sizes = [1, 64], strides = [1, 1]} : vector<9x64xf32> to vector<1x64xf32>
    %15 = vector.shape_cast %14 : vector<1x64xf32> to vector<64xf32>
    %16 = vector.shape_cast %15 : vector<64xf32> to vector<1x1x64xf32>
    %17 = vector.broadcast %16 : vector<1x1x64xf32> to vector<1x16x64xf32>
    %18 = arith.mulf %13, %17 : vector<1x16x64xf32>
    %19 = arith.addf %11, %18 : vector<1x16x64xf32>
    %20 = vector.extract_strided_slice %12 {offsets = [0, 0, 4], sizes = [1, 16, 64], strides = [1, 1, 1]} : vector<1x16x72xf32> to vector<1x16x64xf32>
    %21 = vector.extract_strided_slice %10 {offsets = [1, 0], sizes = [1, 64], strides = [1, 1]} : vector<9x64xf32> to vector<1x64xf32>
    %22 = vector.shape_cast %21 : vector<1x64xf32> to vector<64xf32>
    %23 = vector.shape_cast %22 : vector<64xf32> to vector<1x1x64xf32>
    %24 = vector.broadcast %23 : vector<1x1x64xf32> to vector<1x16x64xf32>
    %25 = arith.mulf %20, %24 : vector<1x16x64xf32>
    %26 = arith.addf %19, %25 : vector<1x16x64xf32>
    %27 = vector.extract_strided_slice %12 {offsets = [0, 0, 8], sizes = [1, 16, 64], strides = [1, 1, 1]} : vector<1x16x72xf32> to vector<1x16x64xf32>
    %28 = vector.extract_strided_slice %10 {offsets = [2, 0], sizes = [1, 64], strides = [1, 1]} : vector<9x64xf32> to vector<1x64xf32>
    %29 = vector.shape_cast %28 : vector<1x64xf32> to vector<64xf32>
    %30 = vector.shape_cast %29 : vector<64xf32> to vector<1x1x64xf32>
    %31 = vector.broadcast %30 : vector<1x1x64xf32> to vector<1x16x64xf32>
    %32 = arith.mulf %27, %31 : vector<1x16x64xf32>
    %33 = arith.addf %26, %32 : vector<1x16x64xf32>
    %c0_22 = arith.constant 0 : index
    %c1_23 = arith.constant 1 : index
    %c0_24 = arith.constant 0 : index
    %34 = vector.load %arg7[%c0_22, %c1_23, %c0_24] : memref<1x18x72xf32, #tpu.memory_space<vmem>>, vector<1x16x72xf32>
    %35 = vector.extract_strided_slice %34 {offsets = [0, 0, 0], sizes = [1, 16, 64], strides = [1, 1, 1]} : vector<1x16x72xf32> to vector<1x16x64xf32>
    %36 = vector.extract_strided_slice %10 {offsets = [3, 0], sizes = [1, 64], strides = [1, 1]} : vector<9x64xf32> to vector<1x64xf32>
    %37 = vector.shape_cast %36 : vector<1x64xf32> to vector<64xf32>
    %38 = vector.shape_cast %37 : vector<64xf32> to vector<1x1x64xf32>
    %39 = vector.broadcast %38 : vector<1x1x64xf32> to vector<1x16x64xf32>
    %40 = arith.mulf %35, %39 : vector<1x16x64xf32>
    %41 = arith.addf %33, %40 : vector<1x16x64xf32>
    %42 = vector.extract_strided_slice %34 {offsets = [0, 0, 4], sizes = [1, 16, 64], strides = [1, 1, 1]} : vector<1x16x72xf32> to vector<1x16x64xf32>
    %43 = vector.extract_strided_slice %10 {offsets = [4, 0], sizes = [1, 64], strides = [1, 1]} : vector<9x64xf32> to vector<1x64xf32>
    %44 = vector.shape_cast %43 : vector<1x64xf32> to vector<64xf32>
    %45 = vector.shape_cast %44 : vector<64xf32> to vector<1x1x64xf32>
    %46 = vector.broadcast %45 : vector<1x1x64xf32> to vector<1x16x64xf32>
    %47 = arith.mulf %42, %46 : vector<1x16x64xf32>
    %48 = arith.addf %41, %47 : vector<1x16x64xf32>
    %49 = vector.extract_strided_slice %34 {offsets = [0, 0, 8], sizes = [1, 16, 64], strides = [1, 1, 1]} : vector<1x16x72xf32> to vector<1x16x64xf32>
    %50 = vector.extract_strided_slice %10 {offsets = [5, 0], sizes = [1, 64], strides = [1, 1]} : vector<9x64xf32> to vector<1x64xf32>
    %51 = vector.shape_cast %50 : vector<1x64xf32> to vector<64xf32>
    %52 = vector.shape_cast %51 : vector<64xf32> to vector<1x1x64xf32>
    %53 = vector.broadcast %52 : vector<1x1x64xf32> to vector<1x16x64xf32>
    %54 = arith.mulf %49, %53 : vector<1x16x64xf32>
    %55 = arith.addf %48, %54 : vector<1x16x64xf32>
    %c0_25 = arith.constant 0 : index
    %c2 = arith.constant 2 : index
    %c0_26 = arith.constant 0 : index
    %56 = vector.load %arg7[%c0_25, %c2, %c0_26] : memref<1x18x72xf32, #tpu.memory_space<vmem>>, vector<1x16x72xf32>
    %57 = vector.extract_strided_slice %56 {offsets = [0, 0, 0], sizes = [1, 16, 64], strides = [1, 1, 1]} : vector<1x16x72xf32> to vector<1x16x64xf32>
    %58 = vector.extract_strided_slice %10 {offsets = [6, 0], sizes = [1, 64], strides = [1, 1]} : vector<9x64xf32> to vector<1x64xf32>
    %59 = vector.shape_cast %58 : vector<1x64xf32> to vector<64xf32>
    %60 = vector.shape_cast %59 : vector<64xf32> to vector<1x1x64xf32>
    %61 = vector.broadcast %60 : vector<1x1x64xf32> to vector<1x16x64xf32>
    %62 = arith.mulf %57, %61 : vector<1x16x64xf32>
    %63 = arith.addf %55, %62 : vector<1x16x64xf32>
    %64 = vector.extract_strided_slice %56 {offsets = [0, 0, 4], sizes = [1, 16, 64], strides = [1, 1, 1]} : vector<1x16x72xf32> to vector<1x16x64xf32>
    %65 = vector.extract_strided_slice %10 {offsets = [7, 0], sizes = [1, 64], strides = [1, 1]} : vector<9x64xf32> to vector<1x64xf32>
    %66 = vector.shape_cast %65 : vector<1x64xf32> to vector<64xf32>
    %67 = vector.shape_cast %66 : vector<64xf32> to vector<1x1x64xf32>
    %68 = vector.broadcast %67 : vector<1x1x64xf32> to vector<1x16x64xf32>
    %69 = arith.mulf %64, %68 : vector<1x16x64xf32>
    %70 = arith.addf %63, %69 : vector<1x16x64xf32>
    %71 = vector.extract_strided_slice %56 {offsets = [0, 0, 8], sizes = [1, 16, 64], strides = [1, 1, 1]} : vector<1x16x72xf32> to vector<1x16x64xf32>
    %72 = vector.extract_strided_slice %10 {offsets = [8, 0], sizes = [1, 64], strides = [1, 1]} : vector<9x64xf32> to vector<1x64xf32>
    %73 = vector.shape_cast %72 : vector<1x64xf32> to vector<64xf32>
    %74 = vector.shape_cast %73 : vector<64xf32> to vector<1x1x64xf32>
    %75 = vector.broadcast %74 : vector<1x1x64xf32> to vector<1x16x64xf32>
    %76 = arith.mulf %71, %75 : vector<1x16x64xf32>
    %77 = arith.addf %70, %76 : vector<1x16x64xf32>
    %c0_27 = arith.constant 0 : index
    %c0_28 = arith.constant 0 : index
    %78 = vector.load %arg3[%c0_27, %c0_28] : memref<1x64xf32, #tpu.memory_space<vmem>>, vector<1x64xf32>
    %79 = vector.shape_cast %78 : vector<1x64xf32> to vector<64xf32>
    %80 = vector.shape_cast %79 : vector<64xf32> to vector<1x1x64xf32>
    %81 = vector.broadcast %80 : vector<1x1x64xf32> to vector<1x16x64xf32>
    %82 = arith.addf %77, %81 : vector<1x16x64xf32>
    %cst_29 = arith.constant 0.000000e+00 : f32
    %83 = vector.broadcast %cst_29 : f32 to vector<1x16x64xf32>
    %84 = arith.maximumf %82, %83 : vector<1x16x64xf32>
    %85 = arith.truncf %84 : vector<1x16x64xf32> to vector<1x16x64xbf16>
    %86 = vector.shape_cast %85 : vector<1x16x64xbf16> to vector<16x64xbf16>
    %c0_30 = arith.constant 0 : index
    %c0_31 = arith.constant 0 : index
    %87 = vector.load %arg4[%c0_30, %c0_31] : memref<64x128xbf16, #tpu.memory_space<vmem>>, vector<64x128xbf16>
    %cst_32 = arith.constant dense<0.000000e+00> : vector<16x128xf32>
    %88 = tpu.matmul %86, %87, %cst_32 {dimension_numbers = #tpu.dot_dimension_numbers<[1], [0], [0], [1], [0, 0, 1, 1], [], []>} : vector<16x64xbf16>, vector<64x128xbf16>, vector<16x128xf32> -> vector<16x128xf32>
    %c0_33 = arith.constant 0 : index
    %c0_34 = arith.constant 0 : index
    %89 = vector.load %arg5[%c0_33, %c0_34] : memref<1x128xf32, #tpu.memory_space<vmem>>, vector<1x128xf32>
    %90 = vector.shape_cast %89 : vector<1x128xf32> to vector<128xf32>
    %91 = vector.shape_cast %90 : vector<128xf32> to vector<1x128xf32>
    %92 = vector.broadcast %91 : vector<1x128xf32> to vector<16x128xf32>
    %93 = arith.addf %88, %92 : vector<16x128xf32>
    %cst_35 = arith.constant 0.000000e+00 : f32
    %94 = vector.broadcast %cst_35 : f32 to vector<16x128xf32>
    %95 = arith.maximumf %93, %94 : vector<16x128xf32>
    %96 = vector.shape_cast %95 : vector<16x128xf32> to vector<1x16x128xf32>
    %c0_36 = arith.constant 0 : index
    %c0_37 = arith.constant 0 : index
    %c0_38 = arith.constant 0 : index
    %97 = vector.load %arg6[%c0_36, %c0_37, %c0_38] : memref<1x16x128xf32, #tpu.memory_space<vmem>>, vector<1x16x128xf32>
    tpu.vector_store %arg6[%c0_36, %c0_37, %c0_38], %96 {strides = array<i32>} : memref<1x16x128xf32, #tpu.memory_space<vmem>>, vector<1x16x128xf32>,
    return
  }
  func.func @transform_0(%arg0: i32) -> (i32, i32, i32) {
    %c0_i32 = arith.constant 0 : i32
    %c0_i32_0 = arith.constant 0 : i32
    %c0_i32_1 = arith.constant 0 : i32
    return %arg0, %c0_i32, %c0_i32_0 : i32, i32, i32
  }
  func.func @transform_1(%arg0: i32) -> (i32, i32) {
    %c0_i32 = arith.constant 0 : i32
    %c0_i32_0 = arith.constant 0 : i32
    %c0_i32_1 = arith.constant 0 : i32
    return %c0_i32, %c0_i32_0 : i32, i32
  }
  func.func @transform_2(%arg0: i32) -> (i32, i32) {
    %c0_i32 = arith.constant 0 : i32
    %c0_i32_0 = arith.constant 0 : i32
    %c0_i32_1 = arith.constant 0 : i32
    return %c0_i32, %c0_i32_0 : i32, i32
  }
  func.func @transform_3(%arg0: i32) -> (i32, i32) {
    %c0_i32 = arith.constant 0 : i32
    %c0_i32_0 = arith.constant 0 : i32
    %c0_i32_1 = arith.constant 0 : i32
    return %c0_i32, %c0_i32_0 : i32, i32
  }
  func.func @transform_4(%arg0: i32) -> (i32, i32) {
    %c0_i32 = arith.constant 0 : i32
    %c0_i32_0 = arith.constant 0 : i32
    %c0_i32_1 = arith.constant 0 : i32
    return %c0_i32, %c0_i32_0 : i32, i32
  }
  func.func @transform_5(%arg0: i32) -> (i32, i32, i32) {
    %c0_i32 = arith.constant 0 : i32
    %c0_i32_0 = arith.constant 0 : i32
    %c0_i32_1 = arith.constant 0 : i32
    return %arg0, %c0_i32, %c0_i32_0 : i32, i32, i32
  }
}

</mosaic_0001>

<llo_original>
// kernel: tpu_custom_call.1
$region0: #{tpu_custom_call.1}
  #allocation0 [shape = 'u32[]', space=smem, size = 0x4, offset = 0x4, fixed_abs, tag = 'smem constant byte address 0x4 - core index']
  #allocation1 [shape = 'u32[144,128]{1,0:T(1,128)}', space=vmem, size = 0x12000, scoped, tag = 'internal scratch']
  #allocation2 [shape = 'f32[1,18,72]{2,1,0:T(8,128)}', space=vmem, size = 0x3000, scoped, tag = 'scratch operand']
  %s0 = inlined_call_operand.hbm [shape: f32[2,16,64], index: 0, kind: input, shape index: {}]
  %s1 = inlined_call_operand.hbm [shape: f32[9,64], index: 1, kind: input, shape index: {}]
  %s2 = inlined_call_operand.vmem [shape: f32[1,64], index: 2, kind: input, shape index: {}]
  %s3 = inlined_call_operand.hbm [shape: bf16[64,128], index: 3, kind: input, shape index: {}]
  %s4 = inlined_call_operand.vmem [shape: f32[1,128], index: 4, kind: input, shape index: {}]
  %s5 = inlined_call_operand.hbm [shape: f32[2,16,128], index: 5, kind: output, shape index: {}]
  %s6 = sld [smem:[#allocation0]]
  $region65: #{tpu_custom_call.1} parent=0
    _
  %s8 = ssub.s32 1, %s6
  %s9 = scalar_select 0, %s8, %s6
  $region1: #{tpu_custom_call.1} parent=0
    #allocation3 [shape = 'u8[16384]{0}', space=vmem, size = 0x4000, scoped, tag = 'input window, operand 0']
    #allocation4 [shape = 's32[2]{0}', space=sflag, size = 0x8, scoped, tag = 'scoped memory for tpu_custom_call.1']
    #allocation5 [shape = 's32[2]{0}', space=sflag, size = 0x8, scoped, tag = 'scoped memory for tpu_custom_call.1']
    #allocation6 [shape = 'u8[8192]{0}', space=vmem, size = 0x2000, scoped, tag = 'input window, operand 1, single buffered']
    #allocation7 [shape = 's32[1]{0}', space=sflag, size = 0x4, scoped, tag = 'scoped memory for tpu_custom_call.1']
    #allocation8 [shape = 'u8[16384]{0}', space=vmem, size = 0x4000, scoped, tag = 'input window, operand 3, single buffered']
    #allocation9 [shape = 'u8[16384]{0}', space=vmem, size = 0x4000, scoped, tag = 'output window, operand 0']
    %10 = vsyncpa [#allocation4], 0
    %s11 = scalar_lea.sflag [#allocation4], 1
    %12 = vsyncpa %s11, 0
    %13 = vsyncpa [#allocation7], 0
    %14 = vsyncpa [#allocation5], 0
    %s15 = scalar_lea.sflag [#allocation5], 1
    %16 = vsyncpa %s15, 0
    loop: start=0, step=1, limit=4
    $region2: #{tpu_custom_call.1} parent=1 // loop_pre_header
      _
    $region3: #{tpu_custom_call.1} parent=1 // loop_header
      %s18 = sphi 0, %s22
      %p19 = scmp.ge.s32.totalorder %s18, 4
      %s28 = sphi 0, %s30
      %s31 = sphi 0, %s28
      %s32 = sphi 0, %s31
      %s48 = sphi 0, %s32
      %s52 = sphi 0, %s52
      %s54 = sphi 0, %s52
      %s55 = sphi 0, %s54
      %s69 = sphi 0, %s55
      %s73 = sphi 0, %s73
      %s75 = sphi 0, %s73
      %s76 = sphi 0, %s75
      %s90 = sphi 0, %s76
      %s94 = sphi 0, %s94
      %s96 = sphi 0, %s94
      %s97 = sphi 0, %s96
      %s111 = sphi 0, %s97
      %s115 = sphi 0, %s115
      %s117 = sphi 0, %s115
      %s118 = sphi 0, %s117
      %s132 = sphi 0, %s118
      %s138 = sphi 0, %s140
      %s141 = sphi 0, %s138
      %s142 = sphi 0, %s141
      %s158 = sphi 0, %s142
    $region4: #{tpu_custom_call.1} parent=1 // loop_header_branch
      %21 = sbr.rel (%p19) target = $region8
    $region5: #{tpu_custom_call.1} parent=1 // loop_body
      %s23 = ssub.s32 %s18, 1
      %s24 = ssub.s32 %s18, 2
      %s25 = sadd.s32 %s18, 1
      %s26 = ssub.s32 %s18, %s25
      %p27 = scmp.eq.s32.totalorder %s26, 0
      %s29 = sadd.s32 %s28, 1
      %s30 = scalar_select %p27, %s28, %s29
      %p33 = pneg %p27
      %p34 = scmp.eq.s32.totalorder %s18, 1
      %p35 = por %p33, %p34
      %p36 = scmp.ne.s32.totalorder %s28, %s31
      %p37 = scmp.eq.s32.totalorder %s18, 0
      %p38 = por %p36, %p37
      %p39 = scmp.ne.s32.totalorder %s28, %s31
      %p40 = scmp.eq.s32.totalorder %s23, 1
      %p41 = por %p39, %p40
      %p42 = scmp.ne.s32.totalorder %s31, %s32
      %p43 = scmp.eq.s32.totalorder %s23, 0
      %p44 = por %p42, %p43
      %p45 = scmp.ne.s32.totalorder %s31, %s32
      %p46 = scmp.eq.s32.totalorder %s24, 1
      %p47 = por %p45, %p46
      %p49 = scmp.ne.s32.totalorder %s32, %s48
      %p50 = scmp.eq.s32.totalorder %s24, 0
      %p51 = por %p49, %p50
      %s53 = sadd.s32 %s52, 1
      %p56 = scmp.eq.s32.totalorder %s18, 1
      %p57 = scmp.ne.s32.totalorder %s52, %s54
      %p58 = scmp.eq.s32.totalorder %s18, 0
      %p59 = por %p57, %p58
      %p60 = scmp.ne.s32.totalorder %s52, %s54
      %p61 = scmp.eq.s32.totalorder %s23, 1
      %p62 = por %p60, %p61
      %p63 = scmp.ne.s32.totalorder %s54, %s55
      %p64 = scmp.eq.s32.totalorder %s23, 0
      %p65 = por %p63, %p64
      %p66 = scmp.ne.s32.totalorder %s54, %s55
      %p67 = scmp.eq.s32.totalorder %s24, 1
      %p68 = por %p66, %p67
      %p70 = scmp.ne.s32.totalorder %s55, %s69
      %p71 = scmp.eq.s32.totalorder %s24, 0
      %p72 = por %p70, %p71
      %s74 = sadd.s32 %s73, 1
      %p77 = scmp.eq.s32.totalorder %s18, 1
      %p78 = scmp.ne.s32.totalorder %s73, %s75
      %p79 = scmp.eq.s32.totalorder %s18, 0
      %p80 = por %p78, %p79
      %p81 = scmp.ne.s32.totalorder %s73, %s75
      %p82 = scmp.eq.s32.totalorder %s23, 1
      %p83 = por %p81, %p82
      %p84 = scmp.ne.s32.totalorder %s75, %s76
      %p85 = scmp.eq.s32.totalorder %s23, 0
      %p86 = por %p84, %p85
      %p87 = scmp.ne.s32.totalorder %s75, %s76
      %p88 = scmp.eq.s32.totalorder %s24, 1
      %p89 = por %p87, %p88
      %p91 = scmp.ne.s32.totalorder %s76, %s90
      %p92 = scmp.eq.s32.totalorder %s24, 0
      %p93 = por %p91, %p92
      %s95 = sadd.s32 %s94, 1
      %p98 = scmp.eq.s32.totalorder %s18, 1
      %p99 = scmp.ne.s32.totalorder %s94, %s96
      %p100 = scmp.eq.s32.totalorder %s18, 0
      %p101 = por %p99, %p100
      %p102 = scmp.ne.s32.totalorder %s94, %s96
      %p103 = scmp.eq.s32.totalorder %s23, 1
      %p104 = por %p102, %p103
      %p105 = scmp.ne.s32.totalorder %s96, %s97
      %p106 = scmp.eq.s32.totalorder %s23, 0
      %p107 = por %p105, %p106
      %p108 = scmp.ne.s32.totalorder %s96, %s97
      %p109 = scmp.eq.s32.totalorder %s24, 1
      %p110 = por %p108, %p109
      %p112 = scmp.ne.s32.totalorder %s97, %s111
      %p113 = scmp.eq.s32.totalorder %s24, 0
      %p114 = por %p112, %p113
      %s116 = sadd.s32 %s115, 1
      %p119 = scmp.eq.s32.totalorder %s18, 1
      %p120 = scmp.ne.s32.totalorder %s115, %s117
      %p121 = scmp.eq.s32.totalorder %s18, 0
      %p122 = por %p120, %p121
      %p123 = scmp.ne.s32.totalorder %s115, %s117
      %p124 = scmp.eq.s32.totalorder %s23, 1
      %p125 = por %p123, %p124
      %p126 = scmp.ne.s32.totalorder %s117, %s118
      %p127 = scmp.eq.s32.totalorder %s23, 0
      %p128 = por %p126, %p127
      %p129 = scmp.ne.s32.totalorder %s117, %s118
      %p130 = scmp.eq.s32.totalorder %s24, 1
      %p131 = por %p129, %p130
      %p133 = scmp.ne.s32.totalorder %s118, %s132
      %p134 = scmp.eq.s32.totalorder %s24, 0
      %p135 = por %p133, %p134
      %s136 = ssub.s32 %s18, %s25
      %p137 = scmp.eq.s32.totalorder %s136, 0
      %s139 = sadd.s32 %s138, 1
      %s140 = scalar_select %p137, %s138, %s139
      %p143 = pneg %p137
      %p144 = scmp.eq.s32.totalorder %s18, 1
      %p145 = por %p143, %p144
      %p146 = scmp.ne.s32.totalorder %s138, %s141
      %p147 = scmp.eq.s32.totalorder %s18, 0
      %p148 = por %p146, %p147
      %p149 = scmp.ne.s32.totalorder %s138, %s141
      %p150 = scmp.eq.s32.totalorder %s23, 1
      %p151 = por %p149, %p150
      %p152 = scmp.ne.s32.totalorder %s141, %s142
      %p153 = scmp.eq.s32.totalorder %s23, 0
      %p154 = por %p152, %p153
      %p155 = scmp.ne.s32.totalorder %s141, %s142
      %p156 = scmp.eq.s32.totalorder %s24, 1
      %p157 = por %p155, %p156
      %p159 = scmp.ne.s32.totalorder %s142, %s158
      %p160 = scmp.eq.s32.totalorder %s24, 0
      %p161 = por %p159, %p160
      %p162 = scmp.le.s32.totalorder 1, %s18
      %p163 = scmp.lt.s32.totalorder %s18, 3
      %p164 = pnand %p162, %p163
      %p165 = pneg %p164
      // Predicated region
      $region9: #{tpu_custom_call.1} parent=5 // pred_check
        _
      $region10: #{tpu_custom_call.1} parent=5 // pred_check_branch
        %167 = sbr.rel (%p164) target = $region12
      $region11: #{tpu_custom_call.1} parent=5 // pred_region
        %s168 = ssub.s32 %s18, 1
        // Predicated region
        $region13: #{tpu_custom_call.1} parent=11 // pred_check
          %p169 = pneg %p65
        $region14: #{tpu_custom_call.1} parent=11 // pred_check_branch
          %171 = sbr.rel (%p169) target = $region16
        $region15: #{tpu_custom_call.1} parent=11 // pred_region
          %s173 = ssub.s32 256, 256
          %174 = vsyncadd [#allocation7], %s173
          %s175 = sshll.u32 [#allocation6], 4
          %s176 = int_to_ptr.vmem [resolvable:$true] %s175
          %181 = dma.hbm_to_vmem [thread:$0]  %s1, 256, %s176, [#allocation7], 128, 128, 8
        $region16: #{tpu_custom_call.1} parent=11 // pred_fallthru
          _
        // Predicated region
        $region17: #{tpu_custom_call.1} parent=11 // pred_check
          %p182 = pneg %p86
        $region18: #{tpu_custom_call.1} parent=11 // pred_check_branch
          %184 = sbr.rel (%p182) target = $region20
        $region19: #{tpu_custom_call.1} parent=11 // pred_region
          _
        $region20: #{tpu_custom_call.1} parent=11 // pred_fallthru
          _
        // Predicated region
        $region21: #{tpu_custom_call.1} parent=11 // pred_check
          %p185 = pneg %p107
        $region22: #{tpu_custom_call.1} parent=11 // pred_check_branch
          %187 = sbr.rel (%p185) target = $region24
        $region23: #{tpu_custom_call.1} parent=11 // pred_region
          %s189 = ssub.s32 512, 512
          %190 = vsyncadd [#allocation7], %s189
          %s191 = sshll.u32 [#allocation8], 4
          %s192 = int_to_ptr.vmem [resolvable:$true] %s191
          %197 = dma.hbm_to_vmem [thread:$0]  %s3, 512, %s192, [#allocation7], 64, 64, 4
        $region24: #{tpu_custom_call.1} parent=11 // pred_fallthru
          _
        // Predicated region
        $region25: #{tpu_custom_call.1} parent=11 // pred_check
          %p198 = pneg %p128
        $region26: #{tpu_custom_call.1} parent=11 // pred_check_branch
          %200 = sbr.rel (%p198) target = $region28
        $region27: #{tpu_custom_call.1} parent=11 // pred_region
          _
        $region28: #{tpu_custom_call.1} parent=11 // pred_fallthru
          _
      $region12: #{tpu_custom_call.1} parent=5 // pred_fallthru
        _
      %p201 = scmp.lt.s32.totalorder %s18, 2
      // Predicated region
      $region29: #{tpu_custom_call.1} parent=5 // pred_check
        %p202 = pneg %p201
      $region30: #{tpu_custom_call.1} parent=5 // pred_check_branch
        %204 = sbr.rel (%p202) target = $region32
      $region31: #{tpu_custom_call.1} parent=5 // pred_region
        // Predicated region
        $region33: #{tpu_custom_call.1} parent=31 // pred_check
          %p205 = pneg %p38
        $region34: #{tpu_custom_call.1} parent=31 // pred_check_branch
          %207 = sbr.rel (%p205) target = $region36
        $region35: #{tpu_custom_call.1} parent=31 // pred_region
          %s208 = sand.u32 %s28, 1
          %s209 = scalar_lea.sflag [#allocation4], %s208
          %s210 = sand.u32 %s28, 1
          %s211 = smul.addr %s210, 16
          %s212 = scalar_lea.vmem [#allocation3], %s211
          %s214 = ssub.s32 256, 256
          %215 = vsyncadd %s209, %s214
          %s216 = smul.addr %s18, 2
          %s217 = smul.addr %s216, 128
          %s218 = scalar_lea.hbm %s0, %s217
          %s219 = sshll.u32 %s212, 4
          %s220 = int_to_ptr.vmem [resolvable:$true] %s219
          %225 = dma.hbm_to_vmem [thread:$0]  %s218, 256, %s220, %s209, 128, 128, 8
        $region36: #{tpu_custom_call.1} parent=31 // pred_fallthru
          _
      $region32: #{tpu_custom_call.1} parent=5 // pred_fallthru
        _
      %p226 = scmp.le.s32.totalorder 1, %s18
      %p227 = scmp.lt.s32.totalorder %s18, 3
      %p228 = pnand %p226, %p227
      %p229 = pneg %p228
      // Predicated region
      $region37: #{tpu_custom_call.1} parent=5 // pred_check
        _
      $region38: #{tpu_custom_call.1} parent=5 // pred_check_branch
        %231 = sbr.rel (%p228) target = $region40
      $region39: #{tpu_custom_call.1} parent=5 // pred_region
        %s232 = ssub.s32 %s18, 1
        %s233 = sand.u32 %s31, 1
        %s234 = scalar_lea.sflag [#allocation4], %s233
        %s235 = sand.u32 %s31, 1
        %s236 = smul.addr %s235, 16
        %s237 = scalar_lea.vmem [#allocation3], %s236
        // Predicated region
        $region41: #{tpu_custom_call.1} parent=39 // pred_check
          %p238 = pneg %p44
        $region42: #{tpu_custom_call.1} parent=39 // pred_check_branch
          %240 = sbr.rel (%p238) target = $region44
        $region43: #{tpu_custom_call.1} parent=39 // pred_region
          %241 = dma.done %s234, 256
        $region44: #{tpu_custom_call.1} parent=39 // pred_fallthru
          _
        // Predicated region
        $region45: #{tpu_custom_call.1} parent=39 // pred_check
          %p242 = pneg %p65
        $region46: #{tpu_custom_call.1} parent=39 // pred_check_branch
          %244 = sbr.rel (%p242) target = $region48
        $region47: #{tpu_custom_call.1} parent=39 // pred_region
          %245 = dma.done [#allocation7], 256
        $region48: #{tpu_custom_call.1} parent=39 // pred_fallthru
          _
        // Predicated region
        $region49: #{tpu_custom_call.1} parent=39 // pred_check
          %p246 = pneg %p107
        $region50: #{tpu_custom_call.1} parent=39 // pred_check_branch
          %248 = sbr.rel (%p246) target = $region52
        $region51: #{tpu_custom_call.1} parent=39 // pred_region
          %249 = dma.done [#allocation7], 512
        $region52: #{tpu_custom_call.1} parent=39 // pred_fallthru
          _
        %s250 = sand.u32 %s31, 1
        %s251 = scalar_lea.sflag [#allocation4], %s250
        %s252 = sand.u32 %s31, 1
        %s253 = smul.addr %s252, 16
        %s254 = scalar_lea.vmem [#allocation3], %s253
        %p255 = pneg %p44
        %p256 = pneg %p41
        %p257 = pneg %p65
        %p258 = pneg %p62
        %p259 = pneg %p86
        %p260 = pneg %p83
        %p261 = pneg %p107
        %p262 = pneg %p104
        %p263 = pneg %p128
        %p264 = pneg %p125
        %p265 = pneg %p154
        %p266 = pneg %p151
        %s267 = sand.u32 %s141, 1
        %s268 = scalar_lea.sflag [#allocation5], %s267
        %s269 = sand.u32 %s141, 1
        %s270 = smul.addr %s269, 16
        %s271 = scalar_lea.vmem [#allocation9], %s270
        %vm273 = vcmask 581632
        %274 = vst.msk [vmem:[#allocation2] sm:$0x1] %vm273, 0.0
        %275 = vst.msk [vmem:[#allocation2 + $0x11] sm:$0x1] %vm273, 0.0
        %vm276 = vcmask 31744
        %277 = vst.msk [vmem:[#allocation2 + $0x1] sm:$0xff] %vm276, 0.0
        %278 = vst.msk [vmem:[#allocation2 + $0x9] sm:$0xff] %vm276, 0.0
        %vm279 = vcmask 589344
        %280 = vst.msk [vmem:[#allocation2 + $0x1] sm:$0xff] %vm279, 0.0
        %281 = vst.msk [vmem:[#allocation2 + $0x9] sm:$0xff] %vm279, 0.0
        %v282 = vld [vmem:[%s237] sm:$0xff]
        %v283 = vld [vmem:[%s237 + $0x8] sm:$0xff]
        %286 = vrot.lane.b32.xlu0 %v282, 4
        %v287 = vpop.permute.xlu0 %286
        %288 = vrot.lane.b32.xlu0 %v283, 4
        %v289 = vpop.permute.xlu0 %288
        %vm292 = vcmask 556064
        %293 = vst.msk [vmem:[#allocation2 + $0x1] sm:$0xff] %vm292, %v287
        %294 = vst.msk [vmem:[#allocation2 + $0x9] sm:$0xff] %vm292, %v289
        %v295 = vld [vmem:[#allocation6] sm:$0xff]
        %v296 = vld [vmem:[#allocation6 + $0x8] sm:$0x1]
        %v297 = vld [vmem:[#allocation2] sm:$0xff]
        %v298 = vld [vmem:[#allocation2 + $0x8] sm:$0xff]
        %v299 = vlaneseq
        %v300 = vshrl.u32 %v299, 7
        %v301 = vsub.s32 0, %v300
        %v302 = vrot.slane %v295, %v301
        %v303 = vmul.f32 %v297, %v302
        %v304 = vmul.f32 %v298, %v302
        %v305 = vadd.f32 %v303, 0.0
        %v306 = vadd.f32 %v304, 0.0
        %v307 = vlaneseq
        %v308 = vshrl.u32 %v307, 7
        %v309 = vsub.s32 1, %v308
        %v310 = vrot.slane %v295, %v309
        %312 = vrot.lane.b32.xlu0 %v310, 4
        %v313 = vpop.permute.xlu0 %312
        %v315 = vmul.f32 %v297, %v313
        %v316 = vmul.f32 %v298, %v313
        %319 = vrot.lane.b32.xlu0 %v315, 124
        %v320 = vpop.permute.xlu0 %319
        %321 = vrot.lane.b32.xlu0 %v316, 124
        %v322 = vpop.permute.xlu0 %321
        %v325 = vadd.f32 %v305, %v320
        %v326 = vadd.f32 %v306, %v322
        %v327 = vlaneseq
        %v328 = vshrl.u32 %v327, 7
        %v329 = vsub.s32 2, %v328
        %v330 = vrot.slane %v295, %v329
        %332 = vrot.lane.b32.xlu0 %v330, 8
        %v333 = vpop.permute.xlu0 %332
        %v335 = vmul.f32 %v297, %v333
        %v336 = vmul.f32 %v298, %v333
        %339 = vrot.lane.b32.xlu0 %v335, 120
        %v340 = vpop.permute.xlu0 %339
        %341 = vrot.lane.b32.xlu0 %v336, 120
        %v342 = vpop.permute.xlu0 %341
        %v345 = vadd.f32 %v325, %v340
        %v346 = vadd.f32 %v326, %v342
        %v347 = vld [vmem:[#allocation2 + $0x1] sm:$0xff]
        %v348 = vld [vmem:[#allocation2 + $0x9] sm:$0xff]
        %v349 = vlaneseq
        %v350 = vshrl.u32 %v349, 7
        %v351 = vsub.s32 3, %v350
        %v352 = vrot.slane %v295, %v351
        %v353 = vmul.f32 %v347, %v352
        %v354 = vmul.f32 %v348, %v352
        %v355 = vadd.f32 %v345, %v353
        %v356 = vadd.f32 %v346, %v354
        %v357 = vlaneseq
        %v358 = vshrl.u32 %v357, 7
        %v359 = vsub.s32 4, %v358
        %v360 = vrot.slane %v295, %v359
        %362 = vrot.lane.b32.xlu0 %v360, 4
        %v363 = vpop.permute.xlu0 %362
        %v365 = vmul.f32 %v347, %v363
        %v366 = vmul.f32 %v348, %v363
        %369 = vrot.lane.b32.xlu0 %v365, 124
        %v370 = vpop.permute.xlu0 %369
        %371 = vrot.lane.b32.xlu0 %v366, 124
        %v372 = vpop.permute.xlu0 %371
        %v375 = vadd.f32 %v355, %v370
        %v376 = vadd.f32 %v356, %v372
        %v377 = vlaneseq
        %v378 = vshrl.u32 %v377, 7
        %v379 = vsub.s32 5, %v378
        %v380 = vrot.slane %v295, %v379
        %382 = vrot.lane.b32.xlu0 %v380, 8
        %v383 = vpop.permute.xlu0 %382
        %v385 = vmul.f32 %v347, %v383
        %v386 = vmul.f32 %v348, %v383
        %389 = vrot.lane.b32.xlu0 %v385, 120
        %v390 = vpop.permute.xlu0 %389
        %391 = vrot.lane.b32.xlu0 %v386, 120
        %v392 = vpop.permute.xlu0 %391
        %v395 = vadd.f32 %v375, %v390
        %v396 = vadd.f32 %v376, %v392
        %v397 = vld [vmem:[#allocation2 + $0x2] sm:$0xff]
        %v398 = vld [vmem:[#allocation2 + $0xa] sm:$0xff]
        %v399 = vlaneseq
        %v400 = vshrl.u32 %v399, 7
        %v401 = vsub.s32 6, %v400
        %v402 = vrot.slane %v295, %v401
        %v403 = vmul.f32 %v397, %v402
        %v404 = vmul.f32 %v398, %v402
        %v405 = vadd.f32 %v395, %v403
        %v406 = vadd.f32 %v396, %v404
        %v407 = vlaneseq
        %v408 = vshrl.u32 %v407, 7
        %v409 = vsub.s32 7, %v408
        %v410 = vrot.slane %v295, %v409
        %412 = vrot.lane.b32.xlu0 %v410, 4
        %v413 = vpop.permute.xlu0 %412
        %v415 = vmul.f32 %v397, %v413
        %v416 = vmul.f32 %v398, %v413
        %419 = vrot.lane.b32.xlu0 %v415, 124
        %v420 = vpop.permute.xlu0 %419
        %421 = vrot.lane.b32.xlu0 %v416, 124
        %v422 = vpop.permute.xlu0 %421
        %v425 = vadd.f32 %v405, %v420
        %v426 = vadd.f32 %v406, %v422
        %v427 = vlaneseq
        %v428 = vshrl.u32 %v427, 7
        %v429 = vsub.s32 0, %v428
        %v430 = vrot.slane %v296, %v429
        %432 = vrot.lane.b32.xlu0 %v430, 8
        %v433 = vpop.permute.xlu0 %432
        %v435 = vmul.f32 %v397, %v433
        %v436 = vmul.f32 %v398, %v433
        %439 = vrot.lane.b32.xlu0 %v435, 120
        %v440 = vpop.permute.xlu0 %439
        %441 = vrot.lane.b32.xlu0 %v436, 120
        %v442 = vpop.permute.xlu0 %441
        %v445 = vadd.f32 %v425, %v440
        %v446 = vadd.f32 %v426, %v442
        %v447 = vld [vmem:[%s2] sm:$0x1]
        %v449 = vlaneseq
        %v450 = vshrl.u32 %v449, 7
        %v451 = vsub.s32 0, %v450
        %v452 = vrot.slane %v447, %v451
        %v454 = vadd.f32 %v445, %v452
        %v455 = vadd.f32 %v446, %v452
        %v456 = vmax.f32 %v454, 0.0
        %v457 = vmax.f32 %v455, 0.0
        %v458 = vpack.c.bf16 %v457, %v456
        %v459 = vld [vmem:[#allocation8] sm:$0xf]
        %v460 = vld [vmem:[#allocation8 + $0x4] sm:$0xf]
        %v461 = vld [vmem:[#allocation8 + $0x8] sm:$0xf]
        %v462 = vld [vmem:[#allocation8 + $0xc] sm:$0xf]
        %v463 = vld [vmem:[#allocation8 + $0x10] sm:$0xf]
        %v464 = vld [vmem:[#allocation8 + $0x14] sm:$0xf]
        %v465 = vld [vmem:[#allocation8 + $0x18] sm:$0xf]
        %v466 = vld [vmem:[#allocation8 + $0x1c] sm:$0xf]
        %v467 = vld [vmem:[%s4] sm:$0x1]
        %v469 = vlaneseq
        %v470 = vshrl.u32 %v469, 7
        %v471 = vsub.s32 0, %v470
        %v472 = vrot.slane %v467, %v471
        %v482 = vunpack.c.l.b16 %v459
        %v483 = vunpack.c.l.b16 %v460
        %v484 = vunpack.c.l.b16 %v461
        %v485 = vunpack.c.l.b16 %v462
        %v486 = vunpack.c.l.b16 %v463
        %v487 = vunpack.c.l.b16 %v464
        %v488 = vunpack.c.l.b16 %v465
        %v489 = vunpack.c.l.b16 %v466
        %v490 = vpack.c.b16 %v483, %v482
        %v491 = vpack.c.b16 %v485, %v484
        %v492 = vpack.c.b16 %v487, %v486
        %v493 = vpack.c.b16 %v489, %v488
        %vm498 = vcmask 523264
        %v500 = vsel %vm498, %v458, 0
        %502 = vmatprep.subr.bf16.mxu0 0
        %503 = vmatpush1.bf16.msra.mxu0 0
        %504 = vmatprep.subr.bf16.mxu0 0
        %505 = vmatpush1.bf16.msra.mxu0 0
        %506 = vmatprep.subr.bf16.mxu0 0
        %507 = vmatpush1.bf16.msra.mxu0 0
        %508 = vmatprep.subr.bf16.mxu0 0
        %509 = vmatpush1.bf16.msra.mxu0 0
        %510 = vmatprep.subr.bf16.mxu0 0
        %511 = vmatpush1.bf16.msra.mxu0 %v493
        %512 = vmatprep.subr.bf16.mxu0 0
        %513 = vmatpush1.bf16.msra.mxu0 %v492
        %514 = vmatprep.subr.bf16.mxu0 0
        %515 = vmatpush1.bf16.msra.mxu0 %v491
        %516 = vmatprep.subr.bf16.mxu0 0
        %517 = vmatpush1.bf16.msra.mxu0 %v490
        %518 = vmatprep.subr.bf16.mxu0 0
        %519 = vmatpush2.bf16.msra.mxu0 0
        %520 = vmatprep.subr.bf16.mxu0 0
        %521 = vmatpush2.bf16.msra.mxu0 0
        %522 = vmatprep.subr.bf16.mxu0 0
        %523 = vmatpush2.bf16.msra.mxu0 0
        %524 = vmatprep.subr.bf16.mxu0 0
        %525 = vmatpush2.bf16.msra.mxu0 0
        %526 = vmatprep.subr.bf16.mxu0 0
        %527 = vmatpush2.bf16.msra.mxu0 0
        %528 = vmatprep.subr.bf16.mxu0 0
        %529 = vmatpush2.bf16.msra.mxu0 0
        %530 = vmatprep.subr.bf16.mxu0 0
        %531 = vmatpush2.bf16.msra.mxu0 0
        %532 = vmatprep.subr.bf16.mxu0 0
        %533 = vmatpush2.bf16.msra.mxu0 0
        %534 = vmatprep.mubr.bf16.mxu0 0
        %535 = vmatmul.mubr.bf16.gmra.mxu0 %v500
        %v536 = vpop.f32.mrf.mxu0
        %v537 = vadd.f32 %v472, %v536
        %v538 = vpop.f32.mrf.mxu0
        %v539 = vpop.f32.mrf.mxu0
        %v540 = vadd.f32 %v472, %v539
        %v541 = vpop.f32.mrf.mxu0
        %542 = vdwg.mxu0
        %v543 = vmax.f32 %v537, 0.0
        %v544 = vmax.f32 %v540, 0.0
        %545 = vst [vmem:[%s271] sm:$0xff] %v543
        %546 = vst [vmem:[%s271 + $0x8] sm:$0xff] %v544
        %s547 = sand.u32 %s141, 1
        %s548 = scalar_lea.sflag [#allocation5], %s547
        %s549 = sand.u32 %s141, 1
        %s550 = smul.addr %s549, 16
        %s551 = scalar_lea.vmem [#allocation9], %s550
        // Predicated region
        $region53: #{tpu_custom_call.1} parent=39 // pred_check
          %p552 = pneg %p151
        $region54: #{tpu_custom_call.1} parent=39 // pred_check_branch
          %554 = sbr.rel (%p552) target = $region56
        $region55: #{tpu_custom_call.1} parent=39 // pred_region
          %s556 = ssub.s32 256, 256
          %557 = vsyncadd %s548, %s556
          %s558 = smul.addr %s23, 2
          %s559 = smul.addr %s558, 128
          %s560 = scalar_lea.hbm %s5, %s559
          %s561 = sshll.u32 %s551, 4
          %s562 = int_to_ptr.vmem [resolvable:$true] %s561
          %567 = dma.vmem_to_hbm [thread:$0]  %s562, 256, %s560, %s548, 128, 128, 8
        $region56: #{tpu_custom_call.1} parent=39 // pred_fallthru
          _
      $region40: #{tpu_custom_call.1} parent=5 // pred_fallthru
        _
      %p568 = scmp.le.s32.totalorder 2, %s18
      // Predicated region
      $region57: #{tpu_custom_call.1} parent=5 // pred_check
        %p569 = pneg %p568
      $region58: #{tpu_custom_call.1} parent=5 // pred_check_branch
        %571 = sbr.rel (%p569) target = $region60
      $region59: #{tpu_custom_call.1} parent=5 // pred_region
        %s572 = ssub.s32 %s18, 2
        // Predicated region
        $region61: #{tpu_custom_call.1} parent=59 // pred_check
          %p573 = pneg %p157
        $region62: #{tpu_custom_call.1} parent=59 // pred_check_branch
          %575 = sbr.rel (%p573) target = $region64
        $region63: #{tpu_custom_call.1} parent=59 // pred_region
          %s576 = sand.u32 %s142, 1
          %s577 = scalar_lea.sflag [#allocation5], %s576
          %s578 = sand.u32 %s142, 1
          %s579 = smul.addr %s578, 16
          %s580 = scalar_lea.vmem [#allocation9], %s579
          %581 = dma.done %s577, 256
        $region64: #{tpu_custom_call.1} parent=59 // pred_fallthru
          _
      $region60: #{tpu_custom_call.1} parent=5 // pred_fallthru
        _
    $region6: #{tpu_custom_call.1} parent=1 // loop_footer
      %s22 = sadd.s32 1, %s18
    $region7: #{tpu_custom_call.1} parent=1 // loop_footer_branch
      %17 = sbr.rel target = $region3
    $region8: #{tpu_custom_call.1} parent=1 // loop_exit
      _
    %582 = vsyncpa [#allocation4], 1
    %s583 = scalar_lea.sflag [#allocation4], 1
    %584 = vsyncpa %s583, 1
    %585 = vsyncpa [#allocation7], 1
    %586 = vsyncpa [#allocation5], 1
    %s587 = scalar_lea.sflag [#allocation5], 1
    %588 = vsyncpa %s587, 1

</llo_original>
